<compile_context>
chip_gen: v5e
topology: v5e:2x2
jax: 0.10.0
libtpu: 0.0.40
codegen_flags: <defaults>
</compile_context>

<pallas_src>
import functools

import jax
import jax.numpy as jnp
from jax.experimental import pallas as pl
from jax.experimental.pallas import tpu as pltpu


def _rel_pos_copy_kernel(ext_ref, o_ref, *, tq, klen, qlen):
    """Copy tq output rows; row (q0 + r) is ext[(qlen-1)-(q0+r) : ... + klen, :]."""
    q0 = pl.program_id(0) * tq
    base = (qlen - 1) - q0          # window start for the first row of this tile

    def copy_row(r, carry):
        # Dynamic-start, static-size sublane window read + store of one q-row.
        o_ref[r] = ext_ref[pl.ds(base - r, klen), :].astype(o_ref.dtype)
        return carry

    jax.lax.fori_loop(0, tq, copy_row, 0, unroll=(tq <= 32))


def _choose_tq(qlen, row_bytes, target_block_bytes=8 << 20):
    """q-tile: multiple of 8 dividing qlen, block ~<= 8 MiB, prefer >= 4 steps."""
    if qlen % 8 != 0:
        return qlen                  # single full block (valid, just unpipelined)
    rows_fit = max(8, (target_block_bytes // max(row_bytes, 1)) // 8 * 8)
    divisors = [t for t in range(8, qlen + 1, 8) if qlen % t == 0]
    # v7x megacore shards the parallel axis over 2 TCs: prefer >= 2 blocks/core.
    for min_steps in (4, 2, 1):
        fitting = [t for t in divisors if t <= rows_fit and qlen // t >= min_steps]
        if fitting:
            return max(fitting)
    return divisors[0]


def relative_positions_encoding(qlen, klen, embedding_size,
                                max_relative_position=127, *,
                                tq=None, out_dtype=jnp.float32):
    """Equivalent of RelativePositionsEncoding(qlen, klen, D).forward(qlen, klen)."""
    D = embedding_size
    M = max_relative_position

    # ---- tiny wrapper-side precompute (pure JAX; lives in VMEM) -------------
    # Sinusoid table, exact match of get_sinusoid_encoding_table(2M+1, D).
    vocab = 2 * M + 1
    pos = jnp.arange(vocab, dtype=jnp.float32)[:, None]
    d = jnp.arange(D)
    angle = pos / jnp.power(jnp.float32(10000.0),
                            2.0 * (d // 2).astype(jnp.float32) / jnp.float32(D))
    table = jnp.where((d % 2) == 0, jnp.sin(angle), jnp.cos(angle))      # (2M+1, D)

    # Extended table along the anti-diagonal t = (qlen-1-q) + k.
    T = qlen + klen - 1
    idx = jnp.clip(jnp.arange(T) - (qlen - 1), -M, M) + M
    ext = table[idx].astype(jnp.float32)                                 # (T, D)
    T_pad = -(-T // 8) * 8                                               # sublane pad
    if T_pad != T:
        ext = jnp.pad(ext, ((0, T_pad - T), (0, 0)))                     # never read

    # ---- tiling --------------------------------------------------------------
    out_itemsize = jnp.dtype(out_dtype).itemsize
    row_bytes = klen * D * out_itemsize
    if tq is None:
        tq = _choose_tq(qlen, row_bytes)
    assert qlen % tq == 0, "tq must divide qlen"
    n_steps = qlen // tq

    # Footprint-derived VMEM limit (double-buffered output block + ext + slack).
    out_block_bytes = tq * klen * D * out_itemsize
    ext_bytes = T_pad * D * 4
    footprint = 2 * out_block_bytes + 2 * ext_bytes + (2 << 20)
    assert footprint <= (48 << 20), (
        f"tq={tq} needs ~{footprint >> 20} MiB VMEM; reduce tq (v7x has 64 MiB/TC).")
    vmem_limit = int(min(max(footprint, 16 << 20), 64 << 20))

    kernel = functools.partial(_rel_pos_copy_kernel, tq=tq, klen=klen, qlen=qlen)

    cost = pl.CostEstimate(
        flops=0,
        transcendentals=0,
        bytes_accessed=qlen * klen * D * out_itemsize + n_steps * ext_bytes,
    )

    return pl.pallas_call(
        kernel,
        out_shape=jax.ShapeDtypeStruct((qlen, klen, D), out_dtype),
        grid_spec=pltpu.PrefetchScalarGridSpec(
            num_scalar_prefetch=0,
            grid=(n_steps,),
            in_specs=[pl.BlockSpec((T_pad, D), lambda i: (0, 0))],
            out_specs=pl.BlockSpec((tq, klen, D), lambda i: (i, 0, 0)),
        ),
        compiler_params=pltpu.CompilerParams(
            dimension_semantics=("parallel",),
            vmem_limit_bytes=vmem_limit,
        ),
        cost_estimate=cost,
    )(ext)


def _reference(qlen, klen, embedding_size, max_relative_position=127):
    """Pure-JAX reference mirroring the PyTorch module (table + gather)."""
    M = max_relative_position
    vocab = 2 * M + 1
    pos = jnp.arange(vocab, dtype=jnp.float32)[:, None]
    d = jnp.arange(embedding_size)
    angle = pos / jnp.power(10000.0, 2.0 * (d // 2).astype(jnp.float32)
                            / float(embedding_size))
    table = jnp.where((d % 2) == 0, jnp.sin(angle), jnp.cos(angle))
    dist = jnp.arange(klen)[None, :] - jnp.arange(qlen)[:, None]
    idx = jnp.clip(dist, -M, M) + M
    return table[idx]


if __name__ == "__main__":
    _ = jax.random.PRNGKey(0)   # forward(qlen, klen) takes only lengths

    # Case 1: qlen == klen, single grid step, default M=127 (no clipping).
    q1, k1, D1 = 8, 8, 32
    out1 = jax.block_until_ready(relative_positions_encoding(q1, k1, D1))
    ref1 = _reference(q1, k1, D1)
    assert out1.shape == (q1, k1, D1)
    assert jnp.allclose(out1, ref1, atol=1e-6, rtol=1e-6)

    # Case 2: qlen != klen, multiple grid steps, clipping active (M=5).
    q2, k2, D2, M2 = 16, 24, 32, 5
    out2 = jax.block_until_ready(
        relative_positions_encoding(q2, k2, D2, max_relative_position=M2))
    ref2 = _reference(q2, k2, D2, max_relative_position=M2)
    assert out2.shape == (q2, k2, D2)
    assert jnp.allclose(out2, ref2, atol=1e-6, rtol=1e-6)

    print("KERNEL_OK")
</pallas_src>

<mosaic_0001>
module attributes {stable_mosaic.version = 11 : i64} {
  func.func @_rel_pos_copy_kernel(%arg0: i32, %arg1: memref<16x32xf32, #tpu.memory_space<vmem>>, %arg2: memref<8x8x32xf32, #tpu.memory_space<vmem>>) attributes {dimension_semantics = [#tpu.dimension_semantics<parallel>], iteration_bounds = array<i64: 1>, scalar_prefetch = 0 : i64, scratch_operands = 0 : i64, tpu.core_type = #tpu.core_type<tc>, window_params = [{pipeline_mode = #tpu.pipeline_mode<synchronous>, transform_indices = @transform_0, window_bounds = array<i64: 16, 32>}, {transform_indices = @transform_1, window_bounds = array<i64: 8, 8, 32>}]} {
    %c8_i32 = arith.constant 8 : i32
    %0 = arith.muli %arg0, %c8_i32 : i32
    %c7_i32 = arith.constant 7 : i32
    %1 = arith.subi %c7_i32, %0 : i32
    %c0_i32 = arith.constant 0 : i32
    %2 = arith.subi %1, %c0_i32 : i32
    %3 = arith.index_cast %2 : i32 to index
    %c0 = arith.constant 0 : index
    %4 = vector.load %arg1[%3, %c0] : memref<16x32xf32, #tpu.memory_space<vmem>>, vector<8x32xf32>
    %5 = arith.index_cast %c0_i32 : i32 to index
    %c0_0 = arith.constant 0 : index
    %c0_1 = arith.constant 0 : index
    %6 = vector.load %arg2[%5, %c0_0, %c0_1] : memref<8x8x32xf32, #tpu.memory_space<vmem>>, vector<1x8x32xf32>
    %7 = vector.shape_cast %6 : vector<1x8x32xf32> to vector<8x32xf32>
    %8 = vector.shape_cast %4 : vector<8x32xf32> to vector<1x8x32xf32>
    tpu.vector_store %arg2[%5, %c0_0, %c0_1], %8 {strides = array<i32>} : memref<8x8x32xf32, #tpu.memory_space<vmem>>, vector<1x8x32xf32>,
    %c1_i32 = arith.constant 1 : i32
    %9 = arith.subi %1, %c1_i32 : i32
    %10 = arith.index_cast %9 : i32 to index
    %c0_2 = arith.constant 0 : index
    %11 = vector.load %arg1[%10, %c0_2] : memref<16x32xf32, #tpu.memory_space<vmem>>, vector<8x32xf32>
    %12 = arith.index_cast %c1_i32 : i32 to index
    %c0_3 = arith.constant 0 : index
    %c0_4 = arith.constant 0 : index
    %13 = vector.load %arg2[%12, %c0_3, %c0_4] : memref<8x8x32xf32, #tpu.memory_space<vmem>>, vector<1x8x32xf32>
    %14 = vector.shape_cast %13 : vector<1x8x32xf32> to vector<8x32xf32>
    %15 = vector.shape_cast %11 : vector<8x32xf32> to vector<1x8x32xf32>
    tpu.vector_store %arg2[%12, %c0_3, %c0_4], %15 {strides = array<i32>} : memref<8x8x32xf32, #tpu.memory_space<vmem>>, vector<1x8x32xf32>,
    %c2_i32 = arith.constant 2 : i32
    %16 = arith.subi %1, %c2_i32 : i32
    %17 = arith.index_cast %16 : i32 to index
    %c0_5 = arith.constant 0 : index
    %18 = vector.load %arg1[%17, %c0_5] : memref<16x32xf32, #tpu.memory_space<vmem>>, vector<8x32xf32>
    %19 = arith.index_cast %c2_i32 : i32 to index
    %c0_6 = arith.constant 0 : index
    %c0_7 = arith.constant 0 : index
    %20 = vector.load %arg2[%19, %c0_6, %c0_7] : memref<8x8x32xf32, #tpu.memory_space<vmem>>, vector<1x8x32xf32>
    %21 = vector.shape_cast %20 : vector<1x8x32xf32> to vector<8x32xf32>
    %22 = vector.shape_cast %18 : vector<8x32xf32> to vector<1x8x32xf32>
    tpu.vector_store %arg2[%19, %c0_6, %c0_7], %22 {strides = array<i32>} : memref<8x8x32xf32, #tpu.memory_space<vmem>>, vector<1x8x32xf32>,
    %c3_i32 = arith.constant 3 : i32
    %23 = arith.subi %1, %c3_i32 : i32
    %24 = arith.index_cast %23 : i32 to index
    %c0_8 = arith.constant 0 : index
    %25 = vector.load %arg1[%24, %c0_8] : memref<16x32xf32, #tpu.memory_space<vmem>>, vector<8x32xf32>
    %26 = arith.index_cast %c3_i32 : i32 to index
    %c0_9 = arith.constant 0 : index
    %c0_10 = arith.constant 0 : index
    %27 = vector.load %arg2[%26, %c0_9, %c0_10] : memref<8x8x32xf32, #tpu.memory_space<vmem>>, vector<1x8x32xf32>
    %28 = vector.shape_cast %27 : vector<1x8x32xf32> to vector<8x32xf32>
    %29 = vector.shape_cast %25 : vector<8x32xf32> to vector<1x8x32xf32>
    tpu.vector_store %arg2[%26, %c0_9, %c0_10], %29 {strides = array<i32>} : memref<8x8x32xf32, #tpu.memory_space<vmem>>, vector<1x8x32xf32>,
    %c4_i32 = arith.constant 4 : i32
    %30 = arith.subi %1, %c4_i32 : i32
    %31 = arith.index_cast %30 : i32 to index
    %c0_11 = arith.constant 0 : index
    %32 = vector.load %arg1[%31, %c0_11] : memref<16x32xf32, #tpu.memory_space<vmem>>, vector<8x32xf32>
    %33 = arith.index_cast %c4_i32 : i32 to index
    %c0_12 = arith.constant 0 : index
    %c0_13 = arith.constant 0 : index
    %34 = vector.load %arg2[%33, %c0_12, %c0_13] : memref<8x8x32xf32, #tpu.memory_space<vmem>>, vector<1x8x32xf32>
    %35 = vector.shape_cast %34 : vector<1x8x32xf32> to vector<8x32xf32>
    %36 = vector.shape_cast %32 : vector<8x32xf32> to vector<1x8x32xf32>
    tpu.vector_store %arg2[%33, %c0_12, %c0_13], %36 {strides = array<i32>} : memref<8x8x32xf32, #tpu.memory_space<vmem>>, vector<1x8x32xf32>,
    %c5_i32 = arith.constant 5 : i32
    %37 = arith.subi %1, %c5_i32 : i32
    %38 = arith.index_cast %37 : i32 to index
    %c0_14 = arith.constant 0 : index
    %39 = vector.load %arg1[%38, %c0_14] : memref<16x32xf32, #tpu.memory_space<vmem>>, vector<8x32xf32>
    %40 = arith.index_cast %c5_i32 : i32 to index
    %c0_15 = arith.constant 0 : index
    %c0_16 = arith.constant 0 : index
    %41 = vector.load %arg2[%40, %c0_15, %c0_16] : memref<8x8x32xf32, #tpu.memory_space<vmem>>, vector<1x8x32xf32>
    %42 = vector.shape_cast %41 : vector<1x8x32xf32> to vector<8x32xf32>
    %43 = vector.shape_cast %39 : vector<8x32xf32> to vector<1x8x32xf32>
    tpu.vector_store %arg2[%40, %c0_15, %c0_16], %43 {strides = array<i32>} : memref<8x8x32xf32, #tpu.memory_space<vmem>>, vector<1x8x32xf32>,
    %c6_i32 = arith.constant 6 : i32
    %44 = arith.subi %1, %c6_i32 : i32
    %45 = arith.index_cast %44 : i32 to index
    %c0_17 = arith.constant 0 : index
    %46 = vector.load %arg1[%45, %c0_17] : memref<16x32xf32, #tpu.memory_space<vmem>>, vector<8x32xf32>
    %47 = arith.index_cast %c6_i32 : i32 to index
    %c0_18 = arith.constant 0 : index
    %c0_19 = arith.constant 0 : index
    %48 = vector.load %arg2[%47, %c0_18, %c0_19] : memref<8x8x32xf32, #tpu.memory_space<vmem>>, vector<1x8x32xf32>
    %49 = vector.shape_cast %48 : vector<1x8x32xf32> to vector<8x32xf32>
    %50 = vector.shape_cast %46 : vector<8x32xf32> to vector<1x8x32xf32>
    tpu.vector_store %arg2[%47, %c0_18, %c0_19], %50 {strides = array<i32>} : memref<8x8x32xf32, #tpu.memory_space<vmem>>, vector<1x8x32xf32>,
    %c7_i32_20 = arith.constant 7 : i32
    %51 = arith.subi %1, %c7_i32_20 : i32
    %52 = arith.index_cast %51 : i32 to index
    %c0_21 = arith.constant 0 : index
    %53 = vector.load %arg1[%52, %c0_21] : memref<16x32xf32, #tpu.memory_space<vmem>>, vector<8x32xf32>
    %54 = arith.index_cast %c7_i32_20 : i32 to index
    %c0_22 = arith.constant 0 : index
    %c0_23 = arith.constant 0 : index
    %55 = vector.load %arg2[%54, %c0_22, %c0_23] : memref<8x8x32xf32, #tpu.memory_space<vmem>>, vector<1x8x32xf32>
    %56 = vector.shape_cast %55 : vector<1x8x32xf32> to vector<8x32xf32>
    %57 = vector.shape_cast %53 : vector<8x32xf32> to vector<1x8x32xf32>
    tpu.vector_store %arg2[%54, %c0_22, %c0_23], %57 {strides = array<i32>} : memref<8x8x32xf32, #tpu.memory_space<vmem>>, vector<1x8x32xf32>,
    %c8_i32_24 = arith.constant 8 : i32
    return
  }
  func.func @transform_0(%arg0: i32) -> (i32, i32) {
    %c0_i32 = arith.constant 0 : i32
    %c0_i32_0 = arith.constant 0 : i32
    %c0_i32_1 = arith.constant 0 : i32
    return %c0_i32, %c0_i32_0 : i32, i32
  }
  func.func @transform_1(%arg0: i32) -> (i32, i32, i32) {
    %c0_i32 = arith.constant 0 : i32
    %c0_i32_0 = arith.constant 0 : i32
    %c0_i32_1 = arith.constant 0 : i32
    return %arg0, %c0_i32, %c0_i32_0 : i32, i32, i32
  }
}

</mosaic_0001>

<llo_original>
// kernel: tpu_custom_call.1
$region0: #{tpu_custom_call.1}
  #allocation0 [shape = 'u32[]', space=smem, size = 0x4, offset = 0x4, fixed_abs, tag = 'smem constant byte address 0x4 - core index']
  #allocation1 [shape = 'u32[72,128]{1,0:T(1,128)}', space=vmem, size = 0x9000, scoped, tag = 'internal scratch']
  %s0 = inlined_call_operand.hbm [shape: f32[16,32], index: 0, kind: input, shape index: {}]
  %s1 = inlined_call_operand.hbm [shape: f32[8,8,32], index: 1, kind: output, shape index: {}]
  %s2 = sld [smem:[#allocation0]]
  $region18: #{tpu_custom_call.1} parent=0
    _
  %s4 = ssub.s32 1, %s2
  %s5 = scalar_select 0, %s4, %s2
  $region1: #{tpu_custom_call.1} parent=0
    #allocation2 [shape = 'u8[8192]{0}', space=vmem, size = 0x2000, scoped, tag = 'input window, operand 0, single buffered']
    #allocation3 [shape = 's32[1]{0}', space=sflag, size = 0x4, scoped, tag = 'scoped memory for tpu_custom_call.1']
    #allocation4 [shape = 's32[1]{0}', space=sflag, size = 0x4, scoped, tag = 'scoped memory for tpu_custom_call.1']
    #allocation5 [shape = 'u8[32768]{0}', space=vmem, size = 0x8000, scoped, tag = 'output window, operand 0, single buffered']
    %6 = vsyncpa [#allocation3], 0
    %7 = vsyncpa [#allocation4], 0
    // Predicated region
    $region2: #{tpu_custom_call.1} parent=1 // pred_check
      _
    $region3: #{tpu_custom_call.1} parent=1 // pred_check_branch
      %9 = sbr.rel (0) target = $region5
    $region4: #{tpu_custom_call.1} parent=1 // pred_region
      %11 = vsyncadd [#allocation3], 0
      %s12 = sshll.u32 %s0, 4
      %s13 = int_to_ptr.hbm [resolvable:$true] %s12
      %s14 = sshll.u32 [#allocation2], 4
      %s15 = int_to_ptr.vmem [resolvable:$true] %s14
      %20 = dma.hbm_to_vmem [thread:$0]  %s13, 256, %s15, [#allocation3], 128, 128, 8
    $region5: #{tpu_custom_call.1} parent=1 // pred_fallthru
      _
    // Predicated region
    $region6: #{tpu_custom_call.1} parent=1 // pred_check
      _
    $region7: #{tpu_custom_call.1} parent=1 // pred_check_branch
      %22 = sbr.rel (0) target = $region9
    $region8: #{tpu_custom_call.1} parent=1 // pred_region
      %24 = dma.done [#allocation3], 256
    $region9: #{tpu_custom_call.1} parent=1 // pred_fallthru
      _
    %s25 = smul.u32 0, 8
    %s26 = ssub.s32 7, %s25
    %s27 = scalar_lea.vmem [#allocation2], %s26
    %v28 = vld [vmem:[%s27] sm:$0xff]
    %vm29 = vcmask 261120
    %30 = vst.msk [vmem:[#allocation5] sm:$0xff] %vm29, %v28
    %s31 = ssub.s32 6, %s25
    %s32 = scalar_lea.vmem [#allocation2], %s31
    %v33 = vld [vmem:[%s32] sm:$0xff]
    %s34 = scalar_lea.vmem [#allocation5], 8
    %35 = vst.msk [vmem:[%s34] sm:$0xff] %vm29, %v33
    %s36 = ssub.s32 5, %s25
    %s37 = scalar_lea.vmem [#allocation2], %s36
    %v38 = vld [vmem:[%s37] sm:$0xff]
    %s39 = scalar_lea.vmem [#allocation5], 16
    %40 = vst.msk [vmem:[%s39] sm:$0xff] %vm29, %v38
    %s41 = ssub.s32 4, %s25
    %s42 = scalar_lea.vmem [#allocation2], %s41
    %v43 = vld [vmem:[%s42] sm:$0xff]
    %s44 = scalar_lea.vmem [#allocation5], 24
    %45 = vst.msk [vmem:[%s44] sm:$0xff] %vm29, %v43
    %s46 = ssub.s32 3, %s25
    %s47 = scalar_lea.vmem [#allocation2], %s46
    %v48 = vld [vmem:[%s47] sm:$0xff]
    %s49 = scalar_lea.vmem [#allocation5], 32
    %50 = vst.msk [vmem:[%s49] sm:$0xff] %vm29, %v48
    %s51 = ssub.s32 2, %s25
    %s52 = scalar_lea.vmem [#allocation2], %s51
    %v53 = vld [vmem:[%s52] sm:$0xff]
    %s54 = scalar_lea.vmem [#allocation5], 40
    %55 = vst.msk [vmem:[%s54] sm:$0xff] %vm29, %v53
    %s56 = ssub.s32 1, %s25
    %s57 = scalar_lea.vmem [#allocation2], %s56
    %v58 = vld [vmem:[%s57] sm:$0xff]
    %s59 = scalar_lea.vmem [#allocation5], 48
    %60 = vst.msk [vmem:[%s59] sm:$0xff] %vm29, %v58
    %s61 = ssub.s32 0, %s25
    %s62 = scalar_lea.vmem [#allocation2], %s61
    %v63 = vld [vmem:[%s62] sm:$0xff]
    %s64 = scalar_lea.vmem [#allocation5], 56
    %65 = vst.msk [vmem:[%s64] sm:$0xff] %vm29, %v63
    // Predicated region
    $region10: #{tpu_custom_call.1} parent=1 // pred_check
      _
    $region11: #{tpu_custom_call.1} parent=1 // pred_check_branch
      %67 = sbr.rel (0) target = $region13
    $region12: #{tpu_custom_call.1} parent=1 // pred_region
      %69 = vsyncadd [#allocation4], 0
      %s70 = sshll.u32 [#allocation5], 4
      %s71 = int_to_ptr.vmem [resolvable:$true] %s70
      %s72 = sshll.u32 %s1, 4
      %s73 = int_to_ptr.hbm [resolvable:$true] %s72
      %78 = dma.vmem_to_hbm [thread:$0]  %s71, 1024, %s73, [#allocation4], 128, 128, 8
    $region13: #{tpu_custom_call.1} parent=1 // pred_fallthru
      _
    // Predicated region
    $region14: #{tpu_custom_call.1} parent=1 // pred_check
      _
    $region15: #{tpu_custom_call.1} parent=1 // pred_check_branch
      %80 = sbr.rel (0) target = $region17
    $region16: #{tpu_custom_call.1} parent=1 // pred_region
      %82 = dma.done [#allocation4], 1024
    $region17: #{tpu_custom_call.1} parent=1 // pred_fallthru
      _
    %83 = vsyncpa [#allocation3], 1
    %84 = vsyncpa [#allocation4], 1

</llo_original>
